<compile_context>
chip_gen: v6e
topology: v6e:2x2x1
jax: 0.10.0
libtpu: 0.0.40
codegen_flags: <defaults>
</compile_context>

<pallas_src>
import jax
import jax.numpy as jnp
from jax.experimental import pallas as pl
from jax.experimental.pallas import tpu as pltpu


_TARGET_BLOCK_BYTES = 2 * 1024 * 1024   # per-feature block ~ knee of the mem-bound curve
_MIN_GRID_STEPS = 4                     # >= 2x TensorCores (v7x) for megacore + pipelining
_DEEP_BUFFER_LAYERS = 8                 # many input streams -> request 3-deep buffering


def _weighted_sum_kernel(w_ref, *refs):
    # w_ref:      (L,) normalized layer weights, f32, SMEM (scalar prefetch)
    # refs[:-1]:  L feature tiles, each (tile_r, C), native dtype, VMEM
    # refs[-1]:   output tile (tile_r, C), native dtype, VMEM
    feat_refs = refs[:-1]
    out_ref = refs[-1]

    acc = w_ref[0] * feat_refs[0][...].astype(jnp.float32)
    for l in range(1, len(feat_refs)):
        acc = acc + w_ref[l] * feat_refs[l][...].astype(jnp.float32)
    out_ref[...] = acc.astype(out_ref.dtype)


def _vmem_limit_bytes():
    try:
        cap = pltpu.get_tpu_info().vmem_capacity_bytes
    except Exception:
        cap = 64 * 1024 * 1024          # conservative default: v7x per-TC VMEM
    # v5e/v6e (128 MiB) -> 64 MiB scoped; v7x (64 MiB) -> 32 MiB scoped.
    return int(min(cap // 2, 64 * 1024 * 1024))


def _choose_layout(E, N, D):
    """Lane-dense (R, C) flattening when E divides by a multiple of 128 (free reshape);
    otherwise keep (N, D) with the full last dim. Never pads / copies the features."""
    for cand in (4096, 2048, 1024, 512, 256, 128):
        if E % cand == 0:
            return E // cand, cand
    return N, D


def featurizer_forward(features, weights):
    """features: list/tuple of L arrays, each (B, T, D), any float dtype (typically bf16).
    weights: (L,) raw learnable params. Returns (B, T, D) in the features' dtype."""
    L = len(features)
    assert weights.shape == (L,), (weights.shape, L)
    B, T, D = features[0].shape
    dtype = features[0].dtype
    itemsize = jnp.dtype(dtype).itemsize
    E = B * T * D

    R, C = _choose_layout(E, B * T, D)
    # Free reshapes only: no pad, no dtype cast in the wrapper.
    flat = [f.reshape(R, C) for f in features]

    # Sublane packing for the second-minor dim: f32 -> 8, bf16 -> 16, int8/fp8 -> 32.
    sublane = max(8, 32 // itemsize)

    # Per-feature block around the mem-bound knee (~2 MiB).
    tile_r = max(sublane, (_TARGET_BLOCK_BYTES // (C * itemsize)) // sublane * sublane)
    # Keep >= _MIN_GRID_STEPS grid steps when R permits (megacore + DMA/compute overlap).
    if R >= _MIN_GRID_STEPS * sublane:
        tile_r = min(tile_r, max(sublane, (R // _MIN_GRID_STEPS) // sublane * sublane))
    # Generation-aware VMEM budget: double-buffered (L inputs + 1 output) blocks.
    vmem_limit = _vmem_limit_bytes()
    budget = (3 * vmem_limit) // 4
    max_rows = budget // (2 * (L + 1) * C * itemsize)
    if max_rows < tile_r:
        tile_r = max(sublane, (max_rows // sublane) * sublane)
    tile_r = min(tile_r, R)
    grid_r = pl.cdiv(R, tile_r)   # boundary partial blocks handled by Pallas masking

    # softmax over the L scalars done once outside; kernel is a pure scalar*vector FMA.
    norm_w = jax.nn.softmax(weights.astype(jnp.float32))

    # index_maps receive the scalar-prefetch ref as a trailing positional arg.
    if L >= _DEEP_BUFFER_LAYERS:
        feat_spec = pl.BlockSpec((tile_r, C), lambda i, w: (i, 0),
                                 pipeline_mode=pl.Buffered(3))
    else:
        feat_spec = pl.BlockSpec((tile_r, C), lambda i, w: (i, 0))

    out = pl.pallas_call(
        _weighted_sum_kernel,
        out_shape=jax.ShapeDtypeStruct((R, C), dtype),
        grid_spec=pltpu.PrefetchScalarGridSpec(
            num_scalar_prefetch=1,            # norm_w -> SMEM once for the whole grid
            grid=(grid_r,),
            in_specs=[feat_spec] * L,
            out_specs=pl.BlockSpec((tile_r, C), lambda i, w: (i, 0)),
        ),
        compiler_params=pltpu.CompilerParams(
            dimension_semantics=("parallel",),
            vmem_limit_bytes=vmem_limit,
        ),
    )(norm_w, *flat)

    return out.reshape(B, T, D)


if __name__ == "__main__":
    key = jax.random.PRNGKey(0)

    def run_case(L, B, T, D, dtype, atol):
        keys = jax.random.split(key, L + 1)
        features = [
            jax.random.normal(keys[i], (B, T, D), dtype=jnp.float32).astype(dtype)
            for i in range(L)
        ]
        # Module initializes weights to zeros; use small deterministic non-zero values
        # for a stronger check of the softmax weighting.
        weights = 0.1 * jax.random.normal(keys[L], (L,), dtype=jnp.float32)

        out = jax.block_until_ready(featurizer_forward(features, weights))

        # pure-JAX reference (f32 accumulation, cast back to the features' dtype)
        norm_w = jax.nn.softmax(weights)
        stacked = jnp.stack([f.astype(jnp.float32) for f in features], axis=0)
        ref = jnp.sum(norm_w[:, None, None, None] * stacked, axis=0).astype(dtype)

        assert out.shape == (B, T, D), out.shape
        assert out.dtype == dtype, out.dtype
        err = float(jnp.max(jnp.abs(out.astype(jnp.float32) - ref.astype(jnp.float32))))
        assert err <= atol, (str(dtype), err)

    # f32, tiny problem: lane-dense flatten, single grid step.
    run_case(L=4, B=2, T=8, D=32, dtype=jnp.float32, atol=1e-5)
    # bf16 native-dtype path: (R=64, C=4096), 4 grid steps (megacore/pipeline exercised).
    run_case(L=6, B=2, T=512, D=256, dtype=jnp.bfloat16, atol=2e-2)
    # E not a multiple of 128: fallback (B*T, D) layout with full last dim, no padding.
    run_case(L=3, B=2, T=3, D=40, dtype=jnp.float32, atol=1e-5)

    print("KERNEL_OK")
</pallas_src>

<mosaic_0001>
module attributes {stable_mosaic.version = 11 : i64} {
  func.func @_weighted_sum_kernel(%arg0: i32, %arg1: memref<4xf32, #tpu.memory_space<smem>>, %arg2: memref<1x512xf32, #tpu.memory_space<vmem>>, %arg3: memref<1x512xf32, #tpu.memory_space<vmem>>, %arg4: memref<1x512xf32, #tpu.memory_space<vmem>>, %arg5: memref<1x512xf32, #tpu.memory_space<vmem>>, %arg6: memref<1x512xf32, #tpu.memory_space<vmem>>) attributes {dimension_semantics = [#tpu.dimension_semantics<parallel>], iteration_bounds = array<i64: 1>, scalar_prefetch = 1 : i64, scratch_operands = 0 : i64, tpu.core_type = #tpu.core_type<tc>, window_params = [{transform_indices = @transform_0, window_bounds = array<i64: 1, 512>}, {transform_indices = @transform_1, window_bounds = array<i64: 1, 512>}, {transform_indices = @transform_2, window_bounds = array<i64: 1, 512>}, {transform_indices = @transform_3, window_bounds = array<i64: 1, 512>}, {transform_indices = @transform_4, window_bounds = array<i64: 1, 512>}]} {
    %c0 = arith.constant 0 : index
    %0 = memref.load %arg1[%c0] : memref<4xf32, #tpu.memory_space<smem>>
    %c0_0 = arith.constant 0 : index
    %c0_1 = arith.constant 0 : index
    %1 = vector.load %arg2[%c0_0, %c0_1] : memref<1x512xf32, #tpu.memory_space<vmem>>, vector<1x512xf32>
    %2 = vector.broadcast %0 : f32 to vector<1x512xf32>
    %3 = arith.mulf %2, %1 : vector<1x512xf32>
    %c1 = arith.constant 1 : index
    %4 = memref.load %arg1[%c1] : memref<4xf32, #tpu.memory_space<smem>>
    %c0_2 = arith.constant 0 : index
    %c0_3 = arith.constant 0 : index
    %5 = vector.load %arg3[%c0_2, %c0_3] : memref<1x512xf32, #tpu.memory_space<vmem>>, vector<1x512xf32>
    %6 = vector.broadcast %4 : f32 to vector<1x512xf32>
    %7 = arith.mulf %6, %5 : vector<1x512xf32>
    %8 = arith.addf %3, %7 : vector<1x512xf32>
    %c2 = arith.constant 2 : index
    %9 = memref.load %arg1[%c2] : memref<4xf32, #tpu.memory_space<smem>>
    %c0_4 = arith.constant 0 : index
    %c0_5 = arith.constant 0 : index
    %10 = vector.load %arg4[%c0_4, %c0_5] : memref<1x512xf32, #tpu.memory_space<vmem>>, vector<1x512xf32>
    %11 = vector.broadcast %9 : f32 to vector<1x512xf32>
    %12 = arith.mulf %11, %10 : vector<1x512xf32>
    %13 = arith.addf %8, %12 : vector<1x512xf32>
    %c3 = arith.constant 3 : index
    %14 = memref.load %arg1[%c3] : memref<4xf32, #tpu.memory_space<smem>>
    %c0_6 = arith.constant 0 : index
    %c0_7 = arith.constant 0 : index
    %15 = vector.load %arg5[%c0_6, %c0_7] : memref<1x512xf32, #tpu.memory_space<vmem>>, vector<1x512xf32>
    %16 = vector.broadcast %14 : f32 to vector<1x512xf32>
    %17 = arith.mulf %16, %15 : vector<1x512xf32>
    %18 = arith.addf %13, %17 : vector<1x512xf32>
    %c0_8 = arith.constant 0 : index
    %c0_9 = arith.constant 0 : index
    %19 = vector.load %arg6[%c0_8, %c0_9] : memref<1x512xf32, #tpu.memory_space<vmem>>, vector<1x512xf32>
    tpu.vector_store %arg6[%c0_8, %c0_9], %18 {strides = array<i32>} : memref<1x512xf32, #tpu.memory_space<vmem>>, vector<1x512xf32>,
    return
  }
  func.func @transform_0(%arg0: i32, %arg1: memref<4xf32, #tpu.memory_space<smem>>) -> (i32, i32) {
    %c0_i32 = arith.constant 0 : i32
    %c0_i32_0 = arith.constant 0 : i32
    return %arg0, %c0_i32 : i32, i32
  }
  func.func @transform_1(%arg0: i32, %arg1: memref<4xf32, #tpu.memory_space<smem>>) -> (i32, i32) {
    %c0_i32 = arith.constant 0 : i32
    %c0_i32_0 = arith.constant 0 : i32
    return %arg0, %c0_i32 : i32, i32
  }
  func.func @transform_2(%arg0: i32, %arg1: memref<4xf32, #tpu.memory_space<smem>>) -> (i32, i32) {
    %c0_i32 = arith.constant 0 : i32
    %c0_i32_0 = arith.constant 0 : i32
    return %arg0, %c0_i32 : i32, i32
  }
  func.func @transform_3(%arg0: i32, %arg1: memref<4xf32, #tpu.memory_space<smem>>) -> (i32, i32) {
    %c0_i32 = arith.constant 0 : i32
    %c0_i32_0 = arith.constant 0 : i32
    return %arg0, %c0_i32 : i32, i32
  }
  func.func @transform_4(%arg0: i32, %arg1: memref<4xf32, #tpu.memory_space<smem>>) -> (i32, i32) {
    %c0_i32 = arith.constant 0 : i32
    %c0_i32_0 = arith.constant 0 : i32
    return %arg0, %c0_i32 : i32, i32
  }
}

</mosaic_0001>

<llo_original>
// kernel: tpu_custom_call.1
$region0: #{tpu_custom_call.1}
  #allocation0 [shape = 'u32[]', space=smem, size = 0x4, offset = 0x4, fixed_abs, tag = 'smem constant byte address 0x4 - core index']
  #allocation1 [shape = 'u32[144,128]{1,0:T(1,128)}', space=vmem, size = 0x12000, scoped, tag = 'internal scratch']
  #allocation2 [shape = 's32[1]{0}', space=sflag, size = 0x4, scoped, tag = 'scoped memory for tpu_custom_call.1']
  #allocation3 [shape = 'u8[512]{0}', space=smem, size = 0x200, scoped, tag = 'prefetched SMEM operand 0']
  %s0 = inlined_call_operand.hbm [shape: f32[4], index: 0, kind: input, shape index: {}]
  %s1 = inlined_call_operand.hbm [shape: f32[1,512], index: 1, kind: input, shape index: {}]
  %s2 = inlined_call_operand.hbm [shape: f32[1,512], index: 2, kind: input, shape index: {}]
  %s3 = inlined_call_operand.vmem [shape: f32[1,512], index: 3, kind: input, shape index: {}]
  %s4 = inlined_call_operand.hbm [shape: f32[1,512], index: 4, kind: input, shape index: {}]
  %s5 = inlined_call_operand.hbm [shape: f32[1,512], index: 5, kind: output, shape index: {}]
  %s6 = sld [smem:[#allocation0]]
  $region38: #{tpu_custom_call.1} parent=0
    _
  %s8 = ssub.s32 1, %s6
  %s9 = scalar_select 0, %s8, %s6
  %11 = dma.hbm_to_smem %s0, 16, [#allocation3], [#allocation2]
  %12 = dma.done [#allocation2], 16
  %13 = sfence
  $region1: #{tpu_custom_call.1} parent=0
    #allocation4 [shape = 'u8[2048]{0}', space=vmem, size = 0x800, scoped, tag = 'input window, operand 1, single buffered']
    #allocation5 [shape = 's32[1]{0}', space=sflag, size = 0x4, scoped, tag = 'scoped memory for tpu_custom_call.1']
    #allocation6 [shape = 's32[1]{0}', space=sflag, size = 0x4, scoped, tag = 'scoped memory for tpu_custom_call.1']
    #allocation7 [shape = 'u8[2048]{0}', space=vmem, size = 0x800, scoped, tag = 'input window, operand 2, single buffered']
    #allocation8 [shape = 's32[1]{0}', space=sflag, size = 0x4, scoped, tag = 'scoped memory for tpu_custom_call.1']
    #allocation9 [shape = 'u8[2048]{0}', space=vmem, size = 0x800, scoped, tag = 'input window, operand 4, single buffered']
    #allocation10 [shape = 'u8[2048]{0}', space=vmem, size = 0x800, scoped, tag = 'output window, operand 0, single buffered']
    %14 = vsyncpa [#allocation5], 0
    %15 = vsyncpa [#allocation8], 0
    %16 = vsyncpa [#allocation6], 0
    // Predicated region
    $region2: #{tpu_custom_call.1} parent=1 // pred_check
      _
    $region3: #{tpu_custom_call.1} parent=1 // pred_check_branch
      %18 = sbr.rel (0) target = $region5
    $region4: #{tpu_custom_call.1} parent=1 // pred_region
      %s20 = ssub.s32 64, 64
      %21 = vsyncadd [#allocation5], %s20
      %s23 = sshll.u32 [#allocation4], 4
      %s24 = int_to_ptr.vmem [resolvable:$true] %s23
      %26 = dma.hbm_to_vmem [thread:$0]  %s1, 64, %s24, [#allocation5]
    $region5: #{tpu_custom_call.1} parent=1 // pred_fallthru
      _
    // Predicated region
    $region6: #{tpu_custom_call.1} parent=1 // pred_check
      _
    $region7: #{tpu_custom_call.1} parent=1 // pred_check_branch
      %28 = sbr.rel (0) target = $region9
    $region8: #{tpu_custom_call.1} parent=1 // pred_region
      %s30 = ssub.s32 64, 64
      %31 = vsyncadd [#allocation8], %s30
      %s33 = sshll.u32 [#allocation7], 4
      %s34 = int_to_ptr.vmem [resolvable:$true] %s33
      %36 = dma.hbm_to_vmem [thread:$0]  %s2, 64, %s34, [#allocation8]
    $region9: #{tpu_custom_call.1} parent=1 // pred_fallthru
      _
    // Predicated region
    $region10: #{tpu_custom_call.1} parent=1 // pred_check
      _
    $region11: #{tpu_custom_call.1} parent=1 // pred_check_branch
      %38 = sbr.rel (0) target = $region13
    $region12: #{tpu_custom_call.1} parent=1 // pred_region
      _
    $region13: #{tpu_custom_call.1} parent=1 // pred_fallthru
      _
    // Predicated region
    $region14: #{tpu_custom_call.1} parent=1 // pred_check
      _
    $region15: #{tpu_custom_call.1} parent=1 // pred_check_branch
      %40 = sbr.rel (0) target = $region17
    $region16: #{tpu_custom_call.1} parent=1 // pred_region
      %s42 = ssub.s32 64, 64
      %43 = vsyncadd [#allocation8], %s42
      %s45 = sshll.u32 [#allocation9], 4
      %s46 = int_to_ptr.vmem [resolvable:$true] %s45
      %48 = dma.hbm_to_vmem [thread:$0]  %s4, 64, %s46, [#allocation8]
    $region17: #{tpu_custom_call.1} parent=1 // pred_fallthru
      _
    // Predicated region
    $region18: #{tpu_custom_call.1} parent=1 // pred_check
      _
    $region19: #{tpu_custom_call.1} parent=1 // pred_check_branch
      %50 = sbr.rel (0) target = $region21
    $region20: #{tpu_custom_call.1} parent=1 // pred_region
      %51 = dma.done [#allocation5], 64
    $region21: #{tpu_custom_call.1} parent=1 // pred_fallthru
      _
    // Predicated region
    $region22: #{tpu_custom_call.1} parent=1 // pred_check
      _
    $region23: #{tpu_custom_call.1} parent=1 // pred_check_branch
      %53 = sbr.rel (0) target = $region25
    $region24: #{tpu_custom_call.1} parent=1 // pred_region
      %54 = dma.done [#allocation8], 64
    $region25: #{tpu_custom_call.1} parent=1 // pred_fallthru
      _
    // Predicated region
    $region26: #{tpu_custom_call.1} parent=1 // pred_check
      _
    $region27: #{tpu_custom_call.1} parent=1 // pred_check_branch
      %56 = sbr.rel (0) target = $region29
    $region28: #{tpu_custom_call.1} parent=1 // pred_region
      %57 = dma.done [#allocation8], 64
    $region29: #{tpu_custom_call.1} parent=1 // pred_fallthru
      _
    %s58 = sld [smem:[#allocation3]]
    %v59 = vld [vmem:[#allocation4] sm:$0xf]
    %v60 = vstv %s58
    %v61 = vmul.f32 %v60, %v59
    %s62 = sld [smem:[#allocation3 + $0x1]]
    %v63 = vld [vmem:[#allocation7] sm:$0xf]
    %v64 = vstv %s62
    %v65 = vmul.f32 %v64, %v63
    %v66 = vadd.f32 %v61, %v65
    %s67 = sld [smem:[#allocation3 + $0x2]]
    %v68 = vld [vmem:[%s3] sm:$0xf]
    %v69 = vstv %s67
    %v70 = vmul.f32 %v69, %v68
    %v71 = vadd.f32 %v66, %v70
    %s72 = sld [smem:[#allocation3 + $0x3]]
    %v73 = vld [vmem:[#allocation9] sm:$0xf]
    %v74 = vstv %s72
    %v75 = vmul.f32 %v74, %v73
    %v76 = vadd.f32 %v71, %v75
    %v77 = vlaneseq
    %vm78 = vcmp.ge.s32.totalorder %v77, 0
    %vm79 = vcmp.lt.s32.totalorder %v77, 512
    %vm80 = vmand %vm78, %vm79
    %81 = vst.msk [vmem:[#allocation10] sm:$0xf] %vm80, %v76
    // Predicated region
    $region30: #{tpu_custom_call.1} parent=1 // pred_check
      _
    $region31: #{tpu_custom_call.1} parent=1 // pred_check_branch
      %83 = sbr.rel (0) target = $region33
    $region32: #{tpu_custom_call.1} parent=1 // pred_region
      %s85 = ssub.s32 64, 64
      %86 = vsyncadd [#allocation6], %s85
      %s88 = sshll.u32 [#allocation10], 4
      %s89 = int_to_ptr.vmem [resolvable:$true] %s88
      %91 = dma.vmem_to_hbm [thread:$0]  %s89, 64, %s5, [#allocation6]
    $region33: #{tpu_custom_call.1} parent=1 // pred_fallthru
      _
    // Predicated region
    $region34: #{tpu_custom_call.1} parent=1 // pred_check
      _
    $region35: #{tpu_custom_call.1} parent=1 // pred_check_branch
      %93 = sbr.rel (0) target = $region37
    $region36: #{tpu_custom_call.1} parent=1 // pred_region
      %94 = dma.done [#allocation6], 64
    $region37: #{tpu_custom_call.1} parent=1 // pred_fallthru
      _
    %95 = vsyncpa [#allocation5], 1
    %96 = vsyncpa [#allocation8], 1
    %97 = vsyncpa [#allocation6], 1

</llo_original>
